<compile_context>
chip_gen: v7x
topology: tpu7x:2x2x1
jax: 0.10.0
libtpu: 0.0.40
codegen_flags: <defaults>
</compile_context>

<pallas_src>
import jax
import jax.numpy as jnp
from jax.experimental import pallas as pl
from jax.experimental.pallas import tpu as pltpu

NEGATIVE_SLOPE = 0.01
F_IN, F_OUT = 35, 85


def _round_up(x, m):
    return ((x + m - 1) // m) * m


def _make_kernel(M, K, N, negative_slope):
    def kernel(x_ref, w_ref, b_ref, o_ref, xp_ref):
        # x_ref: (M, K) raw, w_ref: (K_pad, N_pad), b_ref: (1, N_pad),
        # o_ref: (M, N) raw, xp_ref: (M_pad, K_pad) scratch.
        # Pad the activation into a tile-aligned VMEM scratch; zeros in the
        # contraction-dim padding keep the matmul exact.
        xp_ref[...] = jnp.zeros_like(xp_ref)
        xp_ref[:M, :K] = x_ref[...]
        # Single tile-aligned MXU matmul, default precision, f32 accumulation.
        y = jnp.dot(xp_ref[...], w_ref[...], preferred_element_type=jnp.float32)
        y = y + b_ref[...]                                    # broadcast (1, N_pad)
        y = jnp.where(y > 0.0, y, y * negative_slope)         # leaky-ReLU
        # Write only the valid window (masked store on the ragged lane edge).
        o_ref[...] = y[:M, :N].astype(o_ref.dtype)

    return kernel


def make_linear_leaky(w, b):
    """Pad/cast the static Linear(35, 85) parameters once; return a jitted
    apply(x) whose per-call path is just the pallas_call (no pads / slices)."""
    K, N = w.shape
    K_pad = _round_up(K, 128)
    N_pad = _round_up(N, 128)

    # Hoisted out of the per-call path: done once at init.
    w_p = jnp.pad(w.astype(jnp.float32), ((0, K_pad - K), (0, N_pad - N)))
    b_p = jnp.pad(b.reshape(1, N).astype(jnp.float32), ((0, 0), (0, N_pad - N)))

    vmem = pl.BlockSpec(memory_space=pltpu.MemorySpace.VMEM)

    def apply(x):
        B, S, f_in = x.shape
        M = B * S
        M_pad = _round_up(M, 8)

        kernel = _make_kernel(M, f_in, N, NEGATIVE_SLOPE)

        out = pl.pallas_call(
            kernel,
            out_shape=jax.ShapeDtypeStruct((M, N), jnp.float32),
            in_specs=[vmem, vmem, vmem],
            out_specs=vmem,
            scratch_shapes=[pltpu.VMEM((M_pad, K_pad), jnp.float32)],
            cost_estimate=pl.CostEstimate(
                flops=2 * M_pad * N_pad * K_pad,
                transcendentals=0,
                bytes_accessed=(M * f_in + K_pad * N_pad + N_pad + M * N) * 4,
            ),
        )(x.reshape(M, f_in).astype(jnp.float32), w_p, b_p)

        return out.reshape(B, S, N)

    return jax.jit(apply)


def reference(x, w, b):
    y = jnp.einsum("bsf,fo->bso", x, w) + b
    return jnp.where(y > 0, y, y * NEGATIVE_SLOPE)


if __name__ == "__main__":
    key = jax.random.PRNGKey(0)
    k_x, k_w, k_b = jax.random.split(key, 3)

    B, S = 1, 85
    x1 = jax.random.normal(k_x, (B, S, F_IN), dtype=jnp.float32)
    # Deterministic Linear(35, 85) params, PyTorch-style uniform(-1/sqrt(fan_in), ...)
    bound = 1.0 / (F_IN ** 0.5)
    w = jax.random.uniform(k_w, (F_IN, F_OUT), minval=-bound, maxval=bound,
                           dtype=jnp.float32)
    b = jax.random.uniform(k_b, (F_OUT,), minval=-bound, maxval=bound,
                           dtype=jnp.float32)

    linear_leaky = make_linear_leaky(w, b)
    out = jax.block_until_ready(linear_leaky(x1))

    ref = reference(x1, w, b)
    assert out.shape == (B, S, F_OUT), out.shape
    assert jnp.allclose(out, ref, atol=1e-5, rtol=1e-5), "mismatch vs reference"

    print("KERNEL_OK")
</pallas_src>

<mosaic_0001>
module attributes {stable_mosaic.version = 11 : i64} {
  func.func @kernel(%arg0: memref<85x35xf32, #tpu.memory_space<vmem>>, %arg1: memref<128x128xf32, #tpu.memory_space<vmem>>, %arg2: memref<1x128xf32, #tpu.memory_space<vmem>>, %arg3: memref<85x85xf32, #tpu.memory_space<vmem>>, %arg4: memref<88x128xf32, #tpu.memory_space<vmem>>) attributes {dimension_semantics = [], scalar_prefetch = 0 : i64, scratch_operands = 1 : i64, tpu.core_type = #tpu.core_type<tc>} {
    %cst = arith.constant 0.000000e+00 : f32
    %0 = vector.broadcast %cst : f32 to vector<88x128xf32>
    %c0 = arith.constant 0 : index
    %c0_0 = arith.constant 0 : index
    %1 = vector.load %arg4[%c0, %c0_0] : memref<88x128xf32, #tpu.memory_space<vmem>>, vector<88x128xf32>
    tpu.vector_store %arg4[%c0, %c0_0], %0 {strides = array<i32>} : memref<88x128xf32, #tpu.memory_space<vmem>>, vector<88x128xf32>,
    %c0_1 = arith.constant 0 : index
    %c0_2 = arith.constant 0 : index
    %2 = vector.load %arg0[%c0_1, %c0_2] : memref<85x35xf32, #tpu.memory_space<vmem>>, vector<85x35xf32>
    %c0_3 = arith.constant 0 : index
    %c0_4 = arith.constant 0 : index
    %3 = vector.load %arg4[%c0_3, %c0_4] : memref<88x128xf32, #tpu.memory_space<vmem>>, vector<85x35xf32>
    tpu.vector_store %arg4[%c0_3, %c0_4], %2 {strides = array<i32>} : memref<88x128xf32, #tpu.memory_space<vmem>>, vector<85x35xf32>,
    %c0_5 = arith.constant 0 : index
    %c0_6 = arith.constant 0 : index
    %4 = vector.load %arg4[%c0_5, %c0_6] : memref<88x128xf32, #tpu.memory_space<vmem>>, vector<88x128xf32>
    %c0_7 = arith.constant 0 : index
    %c0_8 = arith.constant 0 : index
    %5 = vector.load %arg1[%c0_7, %c0_8] : memref<128x128xf32, #tpu.memory_space<vmem>>, vector<128x128xf32>
    %cst_9 = arith.constant dense<0.000000e+00> : vector<88x128xf32>
    %6 = tpu.matmul %4, %5, %cst_9 {dimension_numbers = #tpu.dot_dimension_numbers<[1], [0], [0], [1], [0, 0, 1, 1], [], []>} : vector<88x128xf32>, vector<128x128xf32>, vector<88x128xf32> -> vector<88x128xf32>
    %c0_10 = arith.constant 0 : index
    %c0_11 = arith.constant 0 : index
    %7 = vector.load %arg2[%c0_10, %c0_11] : memref<1x128xf32, #tpu.memory_space<vmem>>, vector<1x128xf32>
    %8 = vector.broadcast %7 : vector<1x128xf32> to vector<88x128xf32>
    %9 = arith.addf %6, %8 : vector<88x128xf32>
    %cst_12 = arith.constant 0.000000e+00 : f32
    %10 = vector.broadcast %cst_12 : f32 to vector<88x128xf32>
    %11 = arith.cmpf ogt, %9, %10 : vector<88x128xf32>
    %cst_13 = arith.constant 0.00999999977 : f32
    %12 = vector.broadcast %cst_13 : f32 to vector<88x128xf32>
    %13 = arith.mulf %9, %12 : vector<88x128xf32>
    %14 = arith.select %11, %9, %13 : vector<88x128xi1>, vector<88x128xf32>
    %15 = vector.extract_strided_slice %14 {offsets = [0, 0], sizes = [85, 85], strides = [1, 1]} : vector<88x128xf32> to vector<85x85xf32>
    %c0_14 = arith.constant 0 : index
    %c0_15 = arith.constant 0 : index
    %16 = vector.load %arg3[%c0_14, %c0_15] : memref<85x85xf32, #tpu.memory_space<vmem>>, vector<85x85xf32>
    tpu.vector_store %arg3[%c0_14, %c0_15], %15 {strides = array<i32>} : memref<85x85xf32, #tpu.memory_space<vmem>>, vector<85x85xf32>,
    return
  }
}

</mosaic_0001>

<llo_original>
// kernel: apply.1
$region0: #{apply.1}
  #allocation0 [shape = 'u32[]', space=smem, size = 0x4, offset = 0x4, fixed_abs, tag = 'smem constant byte address 0x4 - core index']
  #allocation1 [shape = 'u32[144,128]{1,0:T(1,128)}', space=vmem, size = 0x12000, scoped, tag = 'internal scratch']
  #allocation2 [shape = 'f32[88,128]{1,0:T(8,128)}', space=vmem, size = 0xb000, scoped, tag = 'scratch operand']
  %s0 = inlined_call_operand.vmem [shape: f32[85,35], index: 0, kind: input, shape index: {}]
  %s1 = inlined_call_operand.vmem [shape: f32[128,128], index: 1, kind: input, shape index: {}]
  %s2 = inlined_call_operand.vmem [shape: f32[1,128], index: 2, kind: input, shape index: {}]
  %s3 = inlined_call_operand.vmem [shape: f32[85,85], index: 3, kind: output, shape index: {}]
  %s4 = sld [smem:[#allocation0]]
  $region22: #{apply.1} parent=0
    _
  %s6 = ssub.s32 1, %s4
  %s7 = scalar_select 0, %s6, %s4
  // Predicated region
  $region2: #{apply.1} parent=0 // pred_check
    _
  $region3: #{apply.1} parent=0 // pred_check_branch
    %9 = sbr.rel (0) target = $region5
  $region4: #{apply.1} parent=0 // pred_region
    _
  $region5: #{apply.1} parent=0 // pred_fallthru
    _
  // Predicated region
  $region6: #{apply.1} parent=0 // pred_check
    _
  $region7: #{apply.1} parent=0 // pred_check_branch
    %11 = sbr.rel (0) target = $region9
  $region8: #{apply.1} parent=0 // pred_region
    _
  $region9: #{apply.1} parent=0 // pred_fallthru
    _
  // Predicated region
  $region10: #{apply.1} parent=0 // pred_check
    _
  $region11: #{apply.1} parent=0 // pred_check_branch
    %13 = sbr.rel (0) target = $region13
  $region12: #{apply.1} parent=0 // pred_region
    _
  $region13: #{apply.1} parent=0 // pred_fallthru
    _
  %14 = vst [vmem:[#allocation2] sm:$0xff] 0.0
  %15 = vst [vmem:[#allocation2 + $0x8] sm:$0xff] 0.0
  %16 = vst [vmem:[#allocation2 + $0x10] sm:$0xff] 0.0
  %17 = vst [vmem:[#allocation2 + $0x18] sm:$0xff] 0.0
  %18 = vst [vmem:[#allocation2 + $0x20] sm:$0xff] 0.0
  %19 = vst [vmem:[#allocation2 + $0x28] sm:$0xff] 0.0
  %20 = vst [vmem:[#allocation2 + $0x30] sm:$0xff] 0.0
  %21 = vst [vmem:[#allocation2 + $0x38] sm:$0xff] 0.0
  %22 = vst [vmem:[#allocation2 + $0x40] sm:$0xff] 0.0
  %23 = vst [vmem:[#allocation2 + $0x48] sm:$0xff] 0.0
  %24 = vst [vmem:[#allocation2 + $0x50] sm:$0xff] 0.0
  %v25 = vld [vmem:[%s0] sm:$0xff]
  %v26 = vld [vmem:[%s0 + $0x8] sm:$0xff]
  %v27 = vld [vmem:[%s0 + $0x10] sm:$0xff]
  %v28 = vld [vmem:[%s0 + $0x18] sm:$0xff]
  %v29 = vld [vmem:[%s0 + $0x20] sm:$0xff]
  %v30 = vld [vmem:[%s0 + $0x28] sm:$0xff]
  %v31 = vld [vmem:[%s0 + $0x30] sm:$0xff]
  %v32 = vld [vmem:[%s0 + $0x38] sm:$0xff]
  %v33 = vld [vmem:[%s0 + $0x40] sm:$0xff]
  %v34 = vld [vmem:[%s0 + $0x48] sm:$0xff]
  %v35 = vld [vmem:[%s0 + $0x50] sm:$0x1f]
  %vm36 = vcmask 285696
  %37 = vst.msk [vmem:[#allocation2] sm:$0xff] %vm36, %v25
  %38 = vst.msk [vmem:[#allocation2 + $0x8] sm:$0xff] %vm36, %v26
  %39 = vst.msk [vmem:[#allocation2 + $0x10] sm:$0xff] %vm36, %v27
  %40 = vst.msk [vmem:[#allocation2 + $0x18] sm:$0xff] %vm36, %v28
  %41 = vst.msk [vmem:[#allocation2 + $0x20] sm:$0xff] %vm36, %v29
  %42 = vst.msk [vmem:[#allocation2 + $0x28] sm:$0xff] %vm36, %v30
  %43 = vst.msk [vmem:[#allocation2 + $0x30] sm:$0xff] %vm36, %v31
  %44 = vst.msk [vmem:[#allocation2 + $0x38] sm:$0xff] %vm36, %v32
  %45 = vst.msk [vmem:[#allocation2 + $0x40] sm:$0xff] %vm36, %v33
  %46 = vst.msk [vmem:[#allocation2 + $0x48] sm:$0xff] %vm36, %v34
  %vm47 = vcmask 282624
  %48 = vst.msk [vmem:[#allocation2 + $0x50] sm:$0x1f] %vm47, %v35
  %v49 = vld [vmem:[#allocation2] sm:$0xff]
  %v50 = vld [vmem:[#allocation2 + $0x8] sm:$0xff]
  %v51 = vld [vmem:[#allocation2 + $0x10] sm:$0xff]
  %v52 = vld [vmem:[#allocation2 + $0x18] sm:$0xff]
  %v53 = vld [vmem:[#allocation2 + $0x20] sm:$0xff]
  %v54 = vld [vmem:[#allocation2 + $0x28] sm:$0xff]
  %v55 = vld [vmem:[#allocation2 + $0x30] sm:$0xff]
  %v56 = vld [vmem:[#allocation2 + $0x38] sm:$0xff]
  %v57 = vld [vmem:[#allocation2 + $0x40] sm:$0xff]
  %v58 = vld [vmem:[#allocation2 + $0x48] sm:$0xff]
  %v59 = vld [vmem:[#allocation2 + $0x50] sm:$0xff]
  %v60 = vld [vmem:[%s1] sm:$0xff]
  %v61 = vld [vmem:[%s1 + $0x8] sm:$0xff]
  %v62 = vld [vmem:[%s1 + $0x10] sm:$0xff]
  %v63 = vld [vmem:[%s1 + $0x18] sm:$0xff]
  %v64 = vld [vmem:[%s1 + $0x20] sm:$0xff]
  %v65 = vld [vmem:[%s1 + $0x28] sm:$0xff]
  %v66 = vld [vmem:[%s1 + $0x30] sm:$0xff]
  %v67 = vld [vmem:[%s1 + $0x38] sm:$0xff]
  %v68 = vld [vmem:[%s1 + $0x40] sm:$0xff]
  %v69 = vld [vmem:[%s1 + $0x48] sm:$0xff]
  %v70 = vld [vmem:[%s1 + $0x50] sm:$0xff]
  %v71 = vld [vmem:[%s1 + $0x58] sm:$0xff]
  %v72 = vld [vmem:[%s1 + $0x60] sm:$0xff]
  %v73 = vld [vmem:[%s1 + $0x68] sm:$0xff]
  %v74 = vld [vmem:[%s1 + $0x70] sm:$0xff]
  %v75 = vld [vmem:[%s1 + $0x78] sm:$0xff]
  %v76 = vld [vmem:[%s2] sm:$0x1]
  %v78 = vlaneseq
  %v79 = vshrl.u32 %v78, 7
  %v80 = vsub.s32 0, %v79
  %v81 = vrot.slane %v76, %v80
  %83 = vmatprep.subr.mxu0 0.0
  %84 = vmatpush1.msra.mxu0 %v60
  %85 = vmatprep.subr.mxu0 0.0
  %86 = vmatpush1.msra.mxu0 %v61
  %87 = vmatprep.subr.mxu0 0.0
  %88 = vmatpush1.msra.mxu0 %v62
  %89 = vmatprep.subr.mxu0 0.0
  %90 = vmatpush1.msra.mxu0 %v63
  %91 = vmatprep.subr.mxu0 0.0
  %92 = vmatpush1.msra.mxu0 %v64
  %93 = vmatprep.subr.mxu0 0.0
  %94 = vmatpush1.msra.mxu0 %v65
  %95 = vmatprep.subr.mxu0 0.0
  %96 = vmatpush1.msra.mxu0 %v66
  %97 = vmatprep.subr.mxu0 0.0
  %98 = vmatpush1.msra.mxu0 %v67
  %99 = vmatprep.subr.mxu0 0.0
  %100 = vmatpush1.msra.mxu0 %v68
  %101 = vmatprep.subr.mxu0 0.0
  %102 = vmatpush1.msra.mxu0 %v69
  %103 = vmatprep.subr.mxu0 0.0
  %104 = vmatpush1.msra.mxu0 %v70
  %105 = vmatprep.subr.mxu0 0.0
  %106 = vmatpush1.msra.mxu0 %v71
  %107 = vmatprep.subr.mxu0 0.0
  %108 = vmatpush1.msra.mxu0 %v72
  %109 = vmatprep.subr.mxu0 0.0
  %110 = vmatpush1.msra.mxu0 %v73
  %111 = vmatprep.subr.mxu0 0.0
  %112 = vmatpush1.msra.mxu0 %v74
  %113 = vmatprep.subr.mxu0 0.0
  %114 = vmatpush1.msra.mxu0 %v75
  %115 = vmatprep.subr.mxu0 0.0
  %116 = vmatpush1.msra.mxu0 0.0
  %117 = vmatprep.subr.mxu0 0.0
  %118 = vmatpush1.msra.mxu0 0.0
  %119 = vmatprep.subr.mxu0 0.0
  %120 = vmatpush1.msra.mxu0 0.0
  %121 = vmatprep.subr.mxu0 0.0
  %122 = vmatpush1.msra.mxu0 0.0
  %123 = vmatprep.subr.mxu0 0.0
  %124 = vmatpush1.msra.mxu0 0.0
  %125 = vmatprep.subr.mxu0 0.0
  %126 = vmatpush1.msra.mxu0 0.0
  %127 = vmatprep.subr.mxu0 0.0
  %128 = vmatpush1.msra.mxu0 0.0
  %129 = vmatprep.subr.mxu0 0.0
  %130 = vmatpush1.msra.mxu0 0.0
  %131 = vmatprep.subr.mxu0 0.0
  %132 = vmatpush1.msra.mxu0 0.0
  %133 = vmatprep.subr.mxu0 0.0
  %134 = vmatpush1.msra.mxu0 0.0
  %135 = vmatprep.subr.mxu0 0.0
  %136 = vmatpush1.msra.mxu0 0.0
  %137 = vmatprep.subr.mxu0 0.0
  %138 = vmatpush1.msra.mxu0 0.0
  %139 = vmatprep.subr.mxu0 0.0
  %140 = vmatpush1.msra.mxu0 0.0
  %141 = vmatprep.subr.mxu0 0.0
  %142 = vmatpush1.msra.mxu0 0.0
  %143 = vmatprep.subr.mxu0 0.0
  %144 = vmatpush1.msra.mxu0 0.0
  %145 = vmatprep.subr.mxu0 0.0
  %146 = vmatpush1.msra.mxu0 0.0
  %147 = vmatprep.mubr.f32.mxu0 0.0
  %148 = vmatmul.mubr.f32.gmra.mrb[0].mxu0 %v49
  %v149 = vpop.f32.mrb[0].mxu0
  %v150 = vadd.f32 %v81, %v149
  %v151 = vpop.f32.mrb[0].mxu0
  %152 = vmatprep.mubr.f32.mxu0 0.0
  %153 = vmatmul.mubr.f32.gmra.mrb[0].mxu0 %v50
  %v154 = vpop.f32.mrb[0].mxu0
  %v155 = vadd.f32 %v81, %v154
  %v156 = vpop.f32.mrb[0].mxu0
  %157 = vmatprep.mubr.f32.mxu0 0.0
  %158 = vmatmul.mubr.f32.gmra.mrb[0].mxu0 %v51
  %v159 = vpop.f32.mrb[0].mxu0
  %v160 = vadd.f32 %v81, %v159
  %v161 = vpop.f32.mrb[0].mxu0
  %162 = vmatprep.mubr.f32.mxu0 0.0
  %163 = vmatmul.mubr.f32.gmra.mrb[0].mxu0 %v52
  %v164 = vpop.f32.mrb[0].mxu0
  %v165 = vadd.f32 %v81, %v164
  %v166 = vpop.f32.mrb[0].mxu0
  %167 = vmatprep.mubr.f32.mxu0 0.0
  %168 = vmatmul.mubr.f32.gmra.mrb[0].mxu0 %v53
  %v169 = vpop.f32.mrb[0].mxu0
  %v170 = vadd.f32 %v81, %v169
  %v171 = vpop.f32.mrb[0].mxu0
  %172 = vmatprep.mubr.f32.mxu0 0.0
  %173 = vmatmul.mubr.f32.gmra.mrb[0].mxu0 %v54
  %v174 = vpop.f32.mrb[0].mxu0
  %v175 = vadd.f32 %v81, %v174
  %v176 = vpop.f32.mrb[0].mxu0
  %177 = vmatprep.mubr.f32.mxu0 0.0
  %178 = vmatmul.mubr.f32.gmra.mrb[0].mxu0 %v55
  %v179 = vpop.f32.mrb[0].mxu0
  %v180 = vadd.f32 %v81, %v179
  %v181 = vpop.f32.mrb[0].mxu0
  %182 = vmatprep.mubr.f32.mxu0 0.0
  %183 = vmatmul.mubr.f32.gmra.mrb[0].mxu0 %v56
  %v184 = vpop.f32.mrb[0].mxu0
  %v185 = vadd.f32 %v81, %v184
  %v186 = vpop.f32.mrb[0].mxu0
  %187 = vmatprep.mubr.f32.mxu0 0.0
  %188 = vmatmul.mubr.f32.gmra.mrb[0].mxu0 %v57
  %v189 = vpop.f32.mrb[0].mxu0
  %v190 = vadd.f32 %v81, %v189
  %v191 = vpop.f32.mrb[0].mxu0
  %192 = vmatprep.mubr.f32.mxu0 0.0
  %193 = vmatmul.mubr.f32.gmra.mrb[0].mxu0 %v58
  %v194 = vpop.f32.mrb[0].mxu0
  %v195 = vadd.f32 %v81, %v194
  %v196 = vpop.f32.mrb[0].mxu0
  %197 = vmatprep.mubr.f32.mxu0 0.0
  %198 = vmatmul.mubr.f32.gmra.mrb[0].mxu0 %v59
  %v199 = vpop.f32.mrb[0].mxu0
  %v200 = vadd.f32 %v81, %v199
  %v201 = vpop.f32.mrb[0].mxu0
  %202 = vdwg.mxu0
  %vm203 = vcmp.gt.f32.partialorder %v150, 0.0
  %vm204 = vcmp.gt.f32.partialorder %v155, 0.0
  %vm205 = vcmp.gt.f32.partialorder %v160, 0.0
  %vm206 = vcmp.gt.f32.partialorder %v165, 0.0
  %vm207 = vcmp.gt.f32.partialorder %v170, 0.0
  %vm208 = vcmp.gt.f32.partialorder %v175, 0.0
  %vm209 = vcmp.gt.f32.partialorder %v180, 0.0
  %vm210 = vcmp.gt.f32.partialorder %v185, 0.0
  %vm211 = vcmp.gt.f32.partialorder %v190, 0.0
  %vm212 = vcmp.gt.f32.partialorder %v195, 0.0
  %vm213 = vcmp.gt.f32.partialorder %v200, 0.0
  %v214 = vmul.f32 %v150, 0.01
  %v215 = vmul.f32 %v155, 0.01
  %v216 = vmul.f32 %v160, 0.01
  %v217 = vmul.f32 %v165, 0.01
  %v218 = vmul.f32 %v170, 0.01
  %v219 = vmul.f32 %v175, 0.01
  %v220 = vmul.f32 %v180, 0.01
  %v221 = vmul.f32 %v185, 0.01
  %v222 = vmul.f32 %v190, 0.01
  %v223 = vmul.f32 %v195, 0.01
  %v224 = vmul.f32 %v200, 0.01
  %v225 = vsel %vm203, %v150, %v214
  %v226 = vsel %vm204, %v155, %v215
  %v227 = vsel %vm205, %v160, %v216
  %v228 = vsel %vm206, %v165, %v217
  %v229 = vsel %vm207, %v170, %v218
  %v230 = vsel %vm208, %v175, %v219
  %v231 = vsel %vm209, %v180, %v220
  %v232 = vsel %vm210, %v185, %v221
  %v233 = vsel %vm211, %v190, %v222
  %v234 = vsel %vm212, %v195, %v223
  %v235 = vsel %vm213, %v200, %v224
  %vm236 = vcmask 695296
  %237 = vst.msk [vmem:[%s3] sm:$0xff] %vm236, %v225
  %238 = vst.msk [vmem:[%s3 + $0x8] sm:$0xff] %vm236, %v226
  %239 = vst.msk [vmem:[%s3 + $0x10] sm:$0xff] %vm236, %v227
  %240 = vst.msk [vmem:[%s3 + $0x18] sm:$0xff] %vm236, %v228
  %241 = vst.msk [vmem:[%s3 + $0x20] sm:$0xff] %vm236, %v229
  %242 = vst.msk [vmem:[%s3 + $0x28] sm:$0xff] %vm236, %v230
  %243 = vst.msk [vmem:[%s3 + $0x30] sm:$0xff] %vm236, %v231
  %244 = vst.msk [vmem:[%s3 + $0x38] sm:$0xff] %vm236, %v232
  %245 = vst.msk [vmem:[%s3 + $0x40] sm:$0xff] %vm236, %v233
  %246 = vst.msk [vmem:[%s3 + $0x48] sm:$0xff] %vm236, %v234
  %vm247 = vcmask 692224
  %248 = vst.msk [vmem:[%s3 + $0x50] sm:$0x1f] %vm247, %v235
  // Predicated region
  $region14: #{apply.1} parent=0 // pred_check
    _
  $region15: #{apply.1} parent=0 // pred_check_branch
    %250 = sbr.rel (0) target = $region17
  $region16: #{apply.1} parent=0 // pred_region
    _
  $region17: #{apply.1} parent=0 // pred_fallthru
    _
  // Predicated region
  $region18: #{apply.1} parent=0 // pred_check
    _
  $region19: #{apply.1} parent=0 // pred_check_branch
    %252 = sbr.rel (0) target = $region21
  $region20: #{apply.1} parent=0 // pred_region
    _
  $region21: #{apply.1} parent=0 // pred_fallthru
    _

</llo_original>
